<compile_context>
chip_gen: v7x
topology: tpu7x:2x2x1
jax: 0.10.0
libtpu: 0.0.40
codegen_flags: <defaults>
</compile_context>

<pallas_src>
import math

import jax
import jax.numpy as jnp
from jax.experimental import pallas as pl
from jax.experimental.pallas import tpu as pltpu


STATE_SIZE = 9
ACTION_SIZE = 3
ACTION_PARAM_SIZE = 3
HIDDEN = 128
OUT_PAD = 128            # lane-dense padded output width (sliced to 3 in wrapper)
NEG_SLOPE = 0.01
DEFAULT_BATCH_TILE = 1024


def _round_up(x, m):
    return ((x + m - 1) // m) * m


def qactor_kernel(s_ref, ap_ref, w1s_ref, w1a_ref, b1_ref, w2_ref, b2_ref, q_ref):
    """One batch tile: two MXU matmuls + leaky_relu, lane-dense output store."""
    # First layer: concat-free — sum of two matmuls over the split W1.
    h = (jnp.dot(s_ref[...], w1s_ref[...], preferred_element_type=jnp.float32)
         + jnp.dot(ap_ref[...], w1a_ref[...], preferred_element_type=jnp.float32)
         + b1_ref[...])                                   # (TB, 128)
    # leaky_relu(h, 0.01) == max(h, 0.01*h) for 0 < slope < 1.
    h = jnp.maximum(h, NEG_SLOPE * h)
    # Output layer (W2 zero-padded to 128 cols -> unmasked full-lane stores).
    q = jnp.dot(h, w2_ref[...], preferred_element_type=jnp.float32) + b2_ref[...]
    q_ref[...] = q.astype(q_ref.dtype)                    # (TB, 128)


def qactor_forward(state, action_parameters, params, *, batch_tile=DEFAULT_BATCH_TILE):
    """Pallas forward. state: (B, 9) f32, action_parameters: (B, 3) f32 -> (B, 3)."""
    w1, b1, w2, b2 = params
    batch = state.shape[0]
    assert batch >= 1

    # Tiny O(features) parameter prep (independent of B):
    #   split W1 by input feature group, zero-pad W2/b2 to 128 output lanes.
    w1_s = w1[:STATE_SIZE, :]                             # (9, 128)
    w1_a = w1[STATE_SIZE:, :]                             # (3, 128)
    w2_p = jnp.pad(w2, ((0, 0), (0, OUT_PAD - ACTION_SIZE)))   # (128, 128)
    b2_p = jnp.pad(b2, ((0, 0), (0, OUT_PAD - ACTION_SIZE)))   # (1, 128)

    # Batch tile: multiple of 8 sublanes; partial final block is handled by
    # Pallas (OOB rows are garbage-in / dropped-on-write, rows are independent).
    tb = min(batch_tile, _round_up(batch, 8))
    grid = (pl.cdiv(batch, tb),)

    q_padded = pl.pallas_call(
        qactor_kernel,
        out_shape=jax.ShapeDtypeStruct((batch, OUT_PAD), jnp.float32),
        grid=grid,
        in_specs=[
            # Streaming activations: one (tb, ·) tile per grid step.
            pl.BlockSpec((tb, STATE_SIZE), lambda i: (i, 0)),
            pl.BlockSpec((tb, ACTION_PARAM_SIZE), lambda i: (i, 0)),
            # Resident parameters: same (0, 0) block for every grid step.
            pl.BlockSpec((STATE_SIZE, HIDDEN), lambda i: (0, 0)),
            pl.BlockSpec((ACTION_PARAM_SIZE, HIDDEN), lambda i: (0, 0)),
            pl.BlockSpec((1, HIDDEN), lambda i: (0, 0)),
            pl.BlockSpec((HIDDEN, OUT_PAD), lambda i: (0, 0)),
            pl.BlockSpec((1, OUT_PAD), lambda i: (0, 0)),
        ],
        out_specs=pl.BlockSpec((tb, OUT_PAD), lambda i: (i, 0)),
        compiler_params=pltpu.CompilerParams(
            dimension_semantics=("parallel",),          # megacore sharding on v7x
            vmem_limit_bytes=32 * 1024 * 1024,          # safe on v5e/v6e/v7x
        ),
    )(state, action_parameters, w1_s, w1_a, b1, w2_p, b2_p)

    # Free layout plumbing: drop the padded lanes.
    return q_padded[:, :ACTION_SIZE]


def init_params(key):
    """Deterministic synthetic init mirroring the PyTorch module's shapes.

    Layer 0: Linear(12, 128), kaiming_normal (leaky_relu gain), zero bias.
    Layer 1: Linear(128, 3),  normal(mean=0, std=1),            zero bias.
    Weights stored as (in, out), i.e. transposed vs nn.Linear's (out, in).
    """
    k1, k2 = jax.random.split(key, 2)
    in0 = STATE_SIZE + ACTION_SIZE                        # 12
    std0 = math.sqrt(2.0 / in0)                           # kaiming, a=0 leaky_relu
    w1 = std0 * jax.random.normal(k1, (in0, HIDDEN), dtype=jnp.float32)
    b1 = jnp.zeros((1, HIDDEN), dtype=jnp.float32)
    w2 = jax.random.normal(k2, (HIDDEN, ACTION_SIZE), dtype=jnp.float32)
    b2 = jnp.zeros((1, ACTION_SIZE), dtype=jnp.float32)
    return (w1, b1, w2, b2)


def qactor_reference(state, action_parameters, params):
    """Pure-JAX reference for correctness checking."""
    w1, b1, w2, b2 = params
    x = jnp.concatenate([state, action_parameters], axis=1)
    h = x @ w1 + b1
    h = jnp.where(h > 0, h, NEG_SLOPE * h)
    return h @ w2 + b2


if __name__ == "__main__":
    key = jax.random.PRNGKey(0)
    k_state, k_ap, k_params = jax.random.split(key, 3)

    batch = 8
    state = jax.random.normal(k_state, (batch, STATE_SIZE), dtype=jnp.float32)
    action_parameters = jax.random.normal(
        k_ap, (batch, ACTION_PARAM_SIZE), dtype=jnp.float32)
    params = init_params(k_params)

    q = qactor_forward(state, action_parameters, params)
    q = jax.block_until_ready(q)

    q_ref = qactor_reference(state, action_parameters, params)
    assert q.shape == (batch, ACTION_SIZE)
    assert jnp.allclose(q, q_ref, atol=1e-5, rtol=1e-5), "mismatch vs reference"

    print("KERNEL_OK")
</pallas_src>

<mosaic_0001>
module attributes {stable_mosaic.version = 11 : i64} {
  func.func @qactor_kernel(%arg0: i32, %arg1: memref<8x9xf32, #tpu.memory_space<vmem>>, %arg2: memref<8x3xf32, #tpu.memory_space<vmem>>, %arg3: memref<9x128xf32, #tpu.memory_space<vmem>>, %arg4: memref<3x128xf32, #tpu.memory_space<vmem>>, %arg5: memref<1x128xf32, #tpu.memory_space<vmem>>, %arg6: memref<128x128xf32, #tpu.memory_space<vmem>>, %arg7: memref<1x128xf32, #tpu.memory_space<vmem>>, %arg8: memref<8x128xf32, #tpu.memory_space<vmem>>) attributes {dimension_semantics = [#tpu.dimension_semantics<parallel>], iteration_bounds = array<i64: 1>, scalar_prefetch = 0 : i64, scratch_operands = 0 : i64, tpu.core_type = #tpu.core_type<tc>, window_params = [{transform_indices = @transform_0, window_bounds = array<i64: 8, 9>}, {transform_indices = @transform_1, window_bounds = array<i64: 8, 3>}, {pipeline_mode = #tpu.pipeline_mode<synchronous>, transform_indices = @transform_2, window_bounds = array<i64: 9, 128>}, {pipeline_mode = #tpu.pipeline_mode<synchronous>, transform_indices = @transform_3, window_bounds = array<i64: 3, 128>}, {pipeline_mode = #tpu.pipeline_mode<synchronous>, transform_indices = @transform_4, window_bounds = array<i64: 1, 128>}, {pipeline_mode = #tpu.pipeline_mode<synchronous>, transform_indices = @transform_5, window_bounds = array<i64: 128, 128>}, {pipeline_mode = #tpu.pipeline_mode<synchronous>, transform_indices = @transform_6, window_bounds = array<i64: 1, 128>}, {transform_indices = @transform_7, window_bounds = array<i64: 8, 128>}]} {
    %c0 = arith.constant 0 : index
    %c0_0 = arith.constant 0 : index
    %0 = vector.load %arg1[%c0, %c0_0] : memref<8x9xf32, #tpu.memory_space<vmem>>, vector<8x9xf32>
    %c0_1 = arith.constant 0 : index
    %c0_2 = arith.constant 0 : index
    %1 = vector.load %arg3[%c0_1, %c0_2] : memref<9x128xf32, #tpu.memory_space<vmem>>, vector<9x128xf32>
    %cst = arith.constant dense<0.000000e+00> : vector<8x128xf32>
    %2 = tpu.matmul %0, %1, %cst {dimension_numbers = #tpu.dot_dimension_numbers<[1], [0], [0], [1], [0, 0, 1, 1], [], []>} : vector<8x9xf32>, vector<9x128xf32>, vector<8x128xf32> -> vector<8x128xf32>
    %c0_3 = arith.constant 0 : index
    %c0_4 = arith.constant 0 : index
    %3 = vector.load %arg2[%c0_3, %c0_4] : memref<8x3xf32, #tpu.memory_space<vmem>>, vector<8x3xf32>
    %c0_5 = arith.constant 0 : index
    %c0_6 = arith.constant 0 : index
    %4 = vector.load %arg4[%c0_5, %c0_6] : memref<3x128xf32, #tpu.memory_space<vmem>>, vector<3x128xf32>
    %cst_7 = arith.constant dense<0.000000e+00> : vector<8x128xf32>
    %5 = tpu.matmul %3, %4, %cst_7 {dimension_numbers = #tpu.dot_dimension_numbers<[1], [0], [0], [1], [0, 0, 1, 1], [], []>} : vector<8x3xf32>, vector<3x128xf32>, vector<8x128xf32> -> vector<8x128xf32>
    %6 = arith.addf %2, %5 : vector<8x128xf32>
    %c0_8 = arith.constant 0 : index
    %c0_9 = arith.constant 0 : index
    %7 = vector.load %arg5[%c0_8, %c0_9] : memref<1x128xf32, #tpu.memory_space<vmem>>, vector<1x128xf32>
    %8 = vector.broadcast %7 : vector<1x128xf32> to vector<8x128xf32>
    %9 = arith.addf %6, %8 : vector<8x128xf32>
    %cst_10 = arith.constant 0.00999999977 : f32
    %10 = vector.broadcast %cst_10 : f32 to vector<8x128xf32>
    %11 = arith.mulf %10, %9 : vector<8x128xf32>
    %12 = arith.maximumf %9, %11 : vector<8x128xf32>
    %c0_11 = arith.constant 0 : index
    %c0_12 = arith.constant 0 : index
    %13 = vector.load %arg6[%c0_11, %c0_12] : memref<128x128xf32, #tpu.memory_space<vmem>>, vector<128x128xf32>
    %cst_13 = arith.constant dense<0.000000e+00> : vector<8x128xf32>
    %14 = tpu.matmul %12, %13, %cst_13 {dimension_numbers = #tpu.dot_dimension_numbers<[1], [0], [0], [1], [0, 0, 1, 1], [], []>} : vector<8x128xf32>, vector<128x128xf32>, vector<8x128xf32> -> vector<8x128xf32>
    %c0_14 = arith.constant 0 : index
    %c0_15 = arith.constant 0 : index
    %15 = vector.load %arg7[%c0_14, %c0_15] : memref<1x128xf32, #tpu.memory_space<vmem>>, vector<1x128xf32>
    %16 = vector.broadcast %15 : vector<1x128xf32> to vector<8x128xf32>
    %17 = arith.addf %14, %16 : vector<8x128xf32>
    %c0_16 = arith.constant 0 : index
    %c0_17 = arith.constant 0 : index
    %18 = vector.load %arg8[%c0_16, %c0_17] : memref<8x128xf32, #tpu.memory_space<vmem>>, vector<8x128xf32>
    tpu.vector_store %arg8[%c0_16, %c0_17], %17 {strides = array<i32>} : memref<8x128xf32, #tpu.memory_space<vmem>>, vector<8x128xf32>,
    return
  }
  func.func @transform_0(%arg0: i32) -> (i32, i32) {
    %c0_i32 = arith.constant 0 : i32
    %c0_i32_0 = arith.constant 0 : i32
    return %arg0, %c0_i32 : i32, i32
  }
  func.func @transform_1(%arg0: i32) -> (i32, i32) {
    %c0_i32 = arith.constant 0 : i32
    %c0_i32_0 = arith.constant 0 : i32
    return %arg0, %c0_i32 : i32, i32
  }
  func.func @transform_2(%arg0: i32) -> (i32, i32) {
    %c0_i32 = arith.constant 0 : i32
    %c0_i32_0 = arith.constant 0 : i32
    %c0_i32_1 = arith.constant 0 : i32
    return %c0_i32, %c0_i32_0 : i32, i32
  }
  func.func @transform_3(%arg0: i32) -> (i32, i32) {
    %c0_i32 = arith.constant 0 : i32
    %c0_i32_0 = arith.constant 0 : i32
    %c0_i32_1 = arith.constant 0 : i32
    return %c0_i32, %c0_i32_0 : i32, i32
  }
  func.func @transform_4(%arg0: i32) -> (i32, i32) {
    %c0_i32 = arith.constant 0 : i32
    %c0_i32_0 = arith.constant 0 : i32
    %c0_i32_1 = arith.constant 0 : i32
    return %c0_i32, %c0_i32_0 : i32, i32
  }
  func.func @transform_5(%arg0: i32) -> (i32, i32) {
    %c0_i32 = arith.constant 0 : i32
    %c0_i32_0 = arith.constant 0 : i32
    %c0_i32_1 = arith.constant 0 : i32
    return %c0_i32, %c0_i32_0 : i32, i32
  }
  func.func @transform_6(%arg0: i32) -> (i32, i32) {
    %c0_i32 = arith.constant 0 : i32
    %c0_i32_0 = arith.constant 0 : i32
    %c0_i32_1 = arith.constant 0 : i32
    return %c0_i32, %c0_i32_0 : i32, i32
  }
  func.func @transform_7(%arg0: i32) -> (i32, i32) {
    %c0_i32 = arith.constant 0 : i32
    %c0_i32_0 = arith.constant 0 : i32
    return %arg0, %c0_i32 : i32, i32
  }
}

</mosaic_0001>

<llo_original>
// kernel: tpu_custom_call.1
$region0: #{tpu_custom_call.1}
  #allocation0 [shape = 'u32[]', space=smem, size = 0x4, offset = 0x4, fixed_abs, tag = 'smem constant byte address 0x4 - core index']
  #allocation1 [shape = 'u32[144,128]{1,0:T(1,128)}', space=vmem, size = 0x12000, scoped, tag = 'internal scratch']
  %s0 = inlined_call_operand.hbm [shape: f32[8,9], index: 0, kind: input, shape index: {}]
  %s1 = inlined_call_operand.vmem [shape: f32[8,3], index: 1, kind: input, shape index: {}]
  %s2 = inlined_call_operand.vmem [shape: f32[9,128], index: 2, kind: input, shape index: {}]
  %s3 = inlined_call_operand.vmem [shape: f32[3,128], index: 3, kind: input, shape index: {}]
  %s4 = inlined_call_operand.vmem [shape: f32[1,128], index: 4, kind: input, shape index: {}]
  %s5 = inlined_call_operand.hbm [shape: f32[128,128], index: 5, kind: input, shape index: {}]
  %s6 = inlined_call_operand.vmem [shape: f32[1,128], index: 6, kind: input, shape index: {}]
  %s7 = inlined_call_operand.hbm [shape: f32[8,128], index: 7, kind: output, shape index: {}]
  %s8 = sld [smem:[#allocation0]]
  $region46: #{tpu_custom_call.1} parent=0
    _
  %s10 = ssub.s32 1, %s8
  %s11 = scalar_select 0, %s10, %s8
  $region1: #{tpu_custom_call.1} parent=0
    #allocation2 [shape = 'u8[4096]{0}', space=vmem, size = 0x1000, scoped, tag = 'input window, operand 0, single buffered']
    #allocation3 [shape = 's32[1]{0}', space=sflag, size = 0x4, scoped, tag = 'scoped memory for tpu_custom_call.1']
    #allocation4 [shape = 's32[1]{0}', space=sflag, size = 0x4, scoped, tag = 'scoped memory for tpu_custom_call.1']
    #allocation5 [shape = 'u8[65536]{0}', space=vmem, size = 0x10000, scoped, tag = 'input window, operand 5, single buffered']
    #allocation6 [shape = 's32[1]{0}', space=sflag, size = 0x4, scoped, tag = 'scoped memory for tpu_custom_call.1']
    #allocation7 [shape = 'u8[4096]{0}', space=vmem, size = 0x1000, scoped, tag = 'output window, operand 0, single buffered']
    %12 = vsyncpa [#allocation3], 0
    %13 = vsyncpa [#allocation6], 0
    %14 = vsyncpa [#allocation4], 0
    // Predicated region
    $region2: #{tpu_custom_call.1} parent=1 // pred_check
      _
    $region3: #{tpu_custom_call.1} parent=1 // pred_check_branch
      %16 = sbr.rel (0) target = $region5
    $region4: #{tpu_custom_call.1} parent=1 // pred_region
      %s18 = ssub.s32 128, 128
      %19 = vsyncadd [#allocation3], %s18
      %s21 = sshll.u32 [#allocation2], 4
      %s22 = int_to_ptr.vmem [resolvable:$true] %s21
      %24 = dma.hbm_to_vmem [thread:$0]  %s0, 128, %s22, [#allocation3]
    $region5: #{tpu_custom_call.1} parent=1 // pred_fallthru
      _
    // Predicated region
    $region6: #{tpu_custom_call.1} parent=1 // pred_check
      _
    $region7: #{tpu_custom_call.1} parent=1 // pred_check_branch
      %26 = sbr.rel (0) target = $region9
    $region8: #{tpu_custom_call.1} parent=1 // pred_region
      _
    $region9: #{tpu_custom_call.1} parent=1 // pred_fallthru
      _
    // Predicated region
    $region10: #{tpu_custom_call.1} parent=1 // pred_check
      _
    $region11: #{tpu_custom_call.1} parent=1 // pred_check_branch
      %28 = sbr.rel (0) target = $region13
    $region12: #{tpu_custom_call.1} parent=1 // pred_region
      _
    $region13: #{tpu_custom_call.1} parent=1 // pred_fallthru
      _
    // Predicated region
    $region14: #{tpu_custom_call.1} parent=1 // pred_check
      _
    $region15: #{tpu_custom_call.1} parent=1 // pred_check_branch
      %30 = sbr.rel (0) target = $region17
    $region16: #{tpu_custom_call.1} parent=1 // pred_region
      _
    $region17: #{tpu_custom_call.1} parent=1 // pred_fallthru
      _
    // Predicated region
    $region18: #{tpu_custom_call.1} parent=1 // pred_check
      _
    $region19: #{tpu_custom_call.1} parent=1 // pred_check_branch
      %32 = sbr.rel (0) target = $region21
    $region20: #{tpu_custom_call.1} parent=1 // pred_region
      _
    $region21: #{tpu_custom_call.1} parent=1 // pred_fallthru
      _
    // Predicated region
    $region22: #{tpu_custom_call.1} parent=1 // pred_check
      _
    $region23: #{tpu_custom_call.1} parent=1 // pred_check_branch
      %34 = sbr.rel (0) target = $region25
    $region24: #{tpu_custom_call.1} parent=1 // pred_region
      %s36 = ssub.s32 2048, 2048
      %37 = vsyncadd [#allocation6], %s36
      %s38 = sshll.u32 [#allocation5], 4
      %s39 = int_to_ptr.vmem [resolvable:$true] %s38
      %44 = dma.hbm_to_vmem [thread:$0]  %s5, 2048, %s39, [#allocation6], 128, 128, 8
    $region25: #{tpu_custom_call.1} parent=1 // pred_fallthru
      _
    // Predicated region
    $region26: #{tpu_custom_call.1} parent=1 // pred_check
      _
    $region27: #{tpu_custom_call.1} parent=1 // pred_check_branch
      %46 = sbr.rel (0) target = $region29
    $region28: #{tpu_custom_call.1} parent=1 // pred_region
      _
    $region29: #{tpu_custom_call.1} parent=1 // pred_fallthru
      _
    // Predicated region
    $region30: #{tpu_custom_call.1} parent=1 // pred_check
      _
    $region31: #{tpu_custom_call.1} parent=1 // pred_check_branch
      %48 = sbr.rel (0) target = $region33
    $region32: #{tpu_custom_call.1} parent=1 // pred_region
      %49 = dma.done [#allocation3], 128
    $region33: #{tpu_custom_call.1} parent=1 // pred_fallthru
      _
    // Predicated region
    $region34: #{tpu_custom_call.1} parent=1 // pred_check
      _
    $region35: #{tpu_custom_call.1} parent=1 // pred_check_branch
      %51 = sbr.rel (0) target = $region37
    $region36: #{tpu_custom_call.1} parent=1 // pred_region
      %52 = dma.done [#allocation6], 2048
    $region37: #{tpu_custom_call.1} parent=1 // pred_fallthru
      _
    %v53 = vld [vmem:[#allocation2] sm:$0xff]
    %v54 = vld [vmem:[%s2] sm:$0xff]
    %v55 = vld [vmem:[%s2 + $0x8] sm:$0x1]
    %v56 = vld [vmem:[%s1] sm:$0xff]
    %v57 = vld [vmem:[%s3] sm:$0x7]
    %vm58 = vcmask 23552
    %v60 = vsel %vm58, %v56, 0
    %vm62 = vcmask 1042432
    %v64 = vsel %vm62, %v57, 0
    %66 = vmatprep.subr.mxu0 0.0
    %67 = vmatpush1.msra.mxu0 %v64
    %68 = vmatprep.subr.mxu0 0.0
    %69 = vmatpush1.msra.mxu0 0.0
    %70 = vmatprep.subr.mxu0 0.0
    %71 = vmatpush1.msra.mxu0 0.0
    %72 = vmatprep.subr.mxu0 0.0
    %73 = vmatpush1.msra.mxu0 0.0
    %74 = vmatprep.subr.mxu0 0.0
    %75 = vmatpush1.msra.mxu0 0.0
    %76 = vmatprep.subr.mxu0 0.0
    %77 = vmatpush1.msra.mxu0 0.0
    %78 = vmatprep.subr.mxu0 0.0
    %79 = vmatpush1.msra.mxu0 0.0
    %80 = vmatprep.subr.mxu0 0.0
    %81 = vmatpush1.msra.mxu0 0.0
    %82 = vmatprep.subr.mxu0 0.0
    %83 = vmatpush1.msra.mxu0 0.0
    %84 = vmatprep.subr.mxu0 0.0
    %85 = vmatpush1.msra.mxu0 0.0
    %86 = vmatprep.subr.mxu0 0.0
    %87 = vmatpush1.msra.mxu0 0.0
    %88 = vmatprep.subr.mxu0 0.0
    %89 = vmatpush1.msra.mxu0 0.0
    %90 = vmatprep.subr.mxu0 0.0
    %91 = vmatpush1.msra.mxu0 0.0
    %92 = vmatprep.subr.mxu0 0.0
    %93 = vmatpush1.msra.mxu0 0.0
    %94 = vmatprep.subr.mxu0 0.0
    %95 = vmatpush1.msra.mxu0 0.0
    %96 = vmatprep.subr.mxu0 0.0
    %97 = vmatpush1.msra.mxu0 0.0
    %98 = vmatprep.subr.mxu0 0.0
    %99 = vmatpush1.msra.mxu0 0.0
    %100 = vmatprep.subr.mxu0 0.0
    %101 = vmatpush1.msra.mxu0 0.0
    %102 = vmatprep.subr.mxu0 0.0
    %103 = vmatpush1.msra.mxu0 0.0
    %104 = vmatprep.subr.mxu0 0.0
    %105 = vmatpush1.msra.mxu0 0.0
    %106 = vmatprep.subr.mxu0 0.0
    %107 = vmatpush1.msra.mxu0 0.0
    %108 = vmatprep.subr.mxu0 0.0
    %109 = vmatpush1.msra.mxu0 0.0
    %110 = vmatprep.subr.mxu0 0.0
    %111 = vmatpush1.msra.mxu0 0.0
    %112 = vmatprep.subr.mxu0 0.0
    %113 = vmatpush1.msra.mxu0 0.0
    %114 = vmatprep.subr.mxu0 0.0
    %115 = vmatpush1.msra.mxu0 0.0
    %116 = vmatprep.subr.mxu0 0.0
    %117 = vmatpush1.msra.mxu0 0.0
    %118 = vmatprep.subr.mxu0 0.0
    %119 = vmatpush1.msra.mxu0 0.0
    %120 = vmatprep.subr.mxu0 0.0
    %121 = vmatpush1.msra.mxu0 0.0
    %122 = vmatprep.subr.mxu0 0.0
    %123 = vmatpush1.msra.mxu0 0.0
    %124 = vmatprep.subr.mxu0 0.0
    %125 = vmatpush1.msra.mxu0 0.0
    %126 = vmatprep.subr.mxu0 0.0
    %127 = vmatpush1.msra.mxu0 0.0
    %128 = vmatprep.subr.mxu0 0.0
    %129 = vmatpush1.msra.mxu0 0.0
    %130 = vmatprep.mubr.f32.mxu0 0.0
    %131 = vmatmul.mubr.f32.gmra.mrb[0].mxu0 %v60
    %v132 = vpop.f32.mrb[0].mxu0
    %v133 = vadd.f32 0.0, %v132
    %v134 = vpop.f32.mrb[0].mxu0
    %135 = vdwg.mxu0
    %vm136 = vcmask 72704
    %v138 = vsel %vm136, %v53, 0
    %vm140 = vcmask 1040384
    %v142 = vsel %vm140, %v55, 0
    %144 = vmatprep.subr.mxu0 0.0
    %145 = vmatpush1.msra.mxu0 %v54
    %146 = vmatprep.subr.mxu0 0.0
    %147 = vmatpush1.msra.mxu0 %v142
    %148 = vmatprep.subr.mxu0 0.0
    %149 = vmatpush1.msra.mxu0 0.0
    %150 = vmatprep.subr.mxu0 0.0
    %151 = vmatpush1.msra.mxu0 0.0
    %152 = vmatprep.subr.mxu0 0.0
    %153 = vmatpush1.msra.mxu0 0.0
    %154 = vmatprep.subr.mxu0 0.0
    %155 = vmatpush1.msra.mxu0 0.0
    %156 = vmatprep.subr.mxu0 0.0
    %157 = vmatpush1.msra.mxu0 0.0
    %158 = vmatprep.subr.mxu0 0.0
    %159 = vmatpush1.msra.mxu0 0.0
    %160 = vmatprep.subr.mxu0 0.0
    %161 = vmatpush1.msra.mxu0 0.0
    %162 = vmatprep.subr.mxu0 0.0
    %163 = vmatpush1.msra.mxu0 0.0
    %164 = vmatprep.subr.mxu0 0.0
    %165 = vmatpush1.msra.mxu0 0.0
    %166 = vmatprep.subr.mxu0 0.0
    %167 = vmatpush1.msra.mxu0 0.0
    %168 = vmatprep.subr.mxu0 0.0
    %169 = vmatpush1.msra.mxu0 0.0
    %170 = vmatprep.subr.mxu0 0.0
    %171 = vmatpush1.msra.mxu0 0.0
    %172 = vmatprep.subr.mxu0 0.0
    %173 = vmatpush1.msra.mxu0 0.0
    %174 = vmatprep.subr.mxu0 0.0
    %175 = vmatpush1.msra.mxu0 0.0
    %176 = vmatprep.subr.mxu0 0.0
    %177 = vmatpush1.msra.mxu0 0.0
    %178 = vmatprep.subr.mxu0 0.0
    %179 = vmatpush1.msra.mxu0 0.0
    %180 = vmatprep.subr.mxu0 0.0
    %181 = vmatpush1.msra.mxu0 0.0
    %182 = vmatprep.subr.mxu0 0.0
    %183 = vmatpush1.msra.mxu0 0.0
    %184 = vmatprep.subr.mxu0 0.0
    %185 = vmatpush1.msra.mxu0 0.0
    %186 = vmatprep.subr.mxu0 0.0
    %187 = vmatpush1.msra.mxu0 0.0
    %188 = vmatprep.subr.mxu0 0.0
    %189 = vmatpush1.msra.mxu0 0.0
    %190 = vmatprep.subr.mxu0 0.0
    %191 = vmatpush1.msra.mxu0 0.0
    %192 = vmatprep.subr.mxu0 0.0
    %193 = vmatpush1.msra.mxu0 0.0
    %194 = vmatprep.subr.mxu0 0.0
    %195 = vmatpush1.msra.mxu0 0.0
    %196 = vmatprep.subr.mxu0 0.0
    %197 = vmatpush1.msra.mxu0 0.0
    %198 = vmatprep.subr.mxu0 0.0
    %199 = vmatpush1.msra.mxu0 0.0
    %200 = vmatprep.subr.mxu0 0.0
    %201 = vmatpush1.msra.mxu0 0.0
    %202 = vmatprep.subr.mxu0 0.0
    %203 = vmatpush1.msra.mxu0 0.0
    %204 = vmatprep.subr.mxu0 0.0
    %205 = vmatpush1.msra.mxu0 0.0
    %206 = vmatprep.subr.mxu0 0.0
    %207 = vmatpush1.msra.mxu0 0.0
    %208 = vmatprep.mubr.f32.mxu0 0.0
    %209 = vmatmul.mubr.f32.gmra.mrb[0].mxu0 %v138
    %v210 = vpop.f32.mrb[0].mxu0
    %v211 = vadd.f32 %v133, %v210
    %v212 = vpop.f32.mrb[0].mxu0
    %213 = vdwg.mxu0
    %v214 = vld [vmem:[%s4] sm:$0x1]
    %v216 = vlaneseq
    %v217 = vshrl.u32 %v216, 7
    %v218 = vsub.s32 0, %v217
    %v219 = vrot.slane %v214, %v218
    %v221 = vadd.f32 %v211, %v219
    %v222 = vmul.f32 %v221, 0.01
    %v223 = vmax.f32 %v221, %v222
    %v224 = vld [vmem:[#allocation5] sm:$0xff]
    %v225 = vld [vmem:[#allocation5 + $0x8] sm:$0xff]
    %v226 = vld [vmem:[#allocation5 + $0x10] sm:$0xff]
    %v227 = vld [vmem:[#allocation5 + $0x18] sm:$0xff]
    %v228 = vld [vmem:[#allocation5 + $0x20] sm:$0xff]
    %v229 = vld [vmem:[#allocation5 + $0x28] sm:$0xff]
    %v230 = vld [vmem:[#allocation5 + $0x30] sm:$0xff]
    %v231 = vld [vmem:[#allocation5 + $0x38] sm:$0xff]
    %v232 = vld [vmem:[#allocation5 + $0x40] sm:$0xff]
    %v233 = vld [vmem:[#allocation5 + $0x48] sm:$0xff]
    %v234 = vld [vmem:[#allocation5 + $0x50] sm:$0xff]
    %v235 = vld [vmem:[#allocation5 + $0x58] sm:$0xff]
    %v236 = vld [vmem:[#allocation5 + $0x60] sm:$0xff]
    %v237 = vld [vmem:[#allocation5 + $0x68] sm:$0xff]
    %v238 = vld [vmem:[#allocation5 + $0x70] sm:$0xff]
    %v239 = vld [vmem:[#allocation5 + $0x78] sm:$0xff]
    %v240 = vld [vmem:[%s6] sm:$0x1]
    %v242 = vlaneseq
    %v243 = vshrl.u32 %v242, 7
    %v244 = vsub.s32 0, %v243
    %v245 = vrot.slane %v240, %v244
    %247 = vmatprep.subr.mxu0 0.0
    %248 = vmatpush1.msra.mxu0 %v224
    %249 = vmatprep.subr.mxu0 0.0
    %250 = vmatpush1.msra.mxu0 %v225
    %251 = vmatprep.subr.mxu0 0.0
    %252 = vmatpush1.msra.mxu0 %v226
    %253 = vmatprep.subr.mxu0 0.0
    %254 = vmatpush1.msra.mxu0 %v227
    %255 = vmatprep.subr.mxu0 0.0
    %256 = vmatpush1.msra.mxu0 %v228
    %257 = vmatprep.subr.mxu0 0.0
    %258 = vmatpush1.msra.mxu0 %v229
    %259 = vmatprep.subr.mxu0 0.0
    %260 = vmatpush1.msra.mxu0 %v230
    %261 = vmatprep.subr.mxu0 0.0
    %262 = vmatpush1.msra.mxu0 %v231
    %263 = vmatprep.subr.mxu0 0.0
    %264 = vmatpush1.msra.mxu0 %v232
    %265 = vmatprep.subr.mxu0 0.0
    %266 = vmatpush1.msra.mxu0 %v233
    %267 = vmatprep.subr.mxu0 0.0
    %268 = vmatpush1.msra.mxu0 %v234
    %269 = vmatprep.subr.mxu0 0.0
    %270 = vmatpush1.msra.mxu0 %v235
    %271 = vmatprep.subr.mxu0 0.0
    %272 = vmatpush1.msra.mxu0 %v236
    %273 = vmatprep.subr.mxu0 0.0
    %274 = vmatpush1.msra.mxu0 %v237
    %275 = vmatprep.subr.mxu0 0.0
    %276 = vmatpush1.msra.mxu0 %v238
    %277 = vmatprep.subr.mxu0 0.0
    %278 = vmatpush1.msra.mxu0 %v239
    %279 = vmatprep.subr.mxu0 0.0
    %280 = vmatpush1.msra.mxu0 0.0
    %281 = vmatprep.subr.mxu0 0.0
    %282 = vmatpush1.msra.mxu0 0.0
    %283 = vmatprep.subr.mxu0 0.0
    %284 = vmatpush1.msra.mxu0 0.0
    %285 = vmatprep.subr.mxu0 0.0
    %286 = vmatpush1.msra.mxu0 0.0
    %287 = vmatprep.subr.mxu0 0.0
    %288 = vmatpush1.msra.mxu0 0.0
    %289 = vmatprep.subr.mxu0 0.0
    %290 = vmatpush1.msra.mxu0 0.0
    %291 = vmatprep.subr.mxu0 0.0
    %292 = vmatpush1.msra.mxu0 0.0
    %293 = vmatprep.subr.mxu0 0.0
    %294 = vmatpush1.msra.mxu0 0.0
    %295 = vmatprep.subr.mxu0 0.0
    %296 = vmatpush1.msra.mxu0 0.0
    %297 = vmatprep.subr.mxu0 0.0
    %298 = vmatpush1.msra.mxu0 0.0
    %299 = vmatprep.subr.mxu0 0.0
    %300 = vmatpush1.msra.mxu0 0.0
    %301 = vmatprep.subr.mxu0 0.0
    %302 = vmatpush1.msra.mxu0 0.0
    %303 = vmatprep.subr.mxu0 0.0
    %304 = vmatpush1.msra.mxu0 0.0
    %305 = vmatprep.subr.mxu0 0.0
    %306 = vmatpush1.msra.mxu0 0.0
    %307 = vmatprep.subr.mxu0 0.0
    %308 = vmatpush1.msra.mxu0 0.0
    %309 = vmatprep.subr.mxu0 0.0
    %310 = vmatpush1.msra.mxu0 0.0
    %311 = vmatprep.mubr.f32.mxu0 0.0
    %312 = vmatmul.mubr.f32.gmra.mrb[0].mxu0 %v223
    %v313 = vpop.f32.mrb[0].mxu0
    %v314 = vadd.f32 %v245, %v313
    %v315 = vpop.f32.mrb[0].mxu0
    %316 = vdwg.mxu0
    %317 = vst [vmem:[#allocation7] sm:$0xff] %v314
    // Predicated region
    $region38: #{tpu_custom_call.1} parent=1 // pred_check
      _
    $region39: #{tpu_custom_call.1} parent=1 // pred_check_branch
      %319 = sbr.rel (0) target = $region41
    $region40: #{tpu_custom_call.1} parent=1 // pred_region
      %s321 = ssub.s32 128, 128
      %322 = vsyncadd [#allocation4], %s321
      %s324 = sshll.u32 [#allocation7], 4
      %s325 = int_to_ptr.vmem [resolvable:$true] %s324
      %327 = dma.vmem_to_hbm [thread:$0]  %s325, 128, %s7, [#allocation4]
    $region41: #{tpu_custom_call.1} parent=1 // pred_fallthru
      _
    // Predicated region
    $region42: #{tpu_custom_call.1} parent=1 // pred_check
      _
    $region43: #{tpu_custom_call.1} parent=1 // pred_check_branch
      %329 = sbr.rel (0) target = $region45
    $region44: #{tpu_custom_call.1} parent=1 // pred_region
      %330 = dma.done [#allocation4], 128
    $region45: #{tpu_custom_call.1} parent=1 // pred_fallthru
      _
    %331 = vsyncpa [#allocation3], 1
    %332 = vsyncpa [#allocation6], 1
    %333 = vsyncpa [#allocation4], 1

</llo_original>
